<compile_context>
chip_gen: v6e
topology: v6e:2x2x1
jax: 0.10.0
libtpu: 0.0.40
codegen_flags: <defaults>
</compile_context>

<pallas_src>
import math
import functools

import jax
import jax.numpy as jnp
from jax.experimental import pallas as pl
from jax.experimental.pallas import tpu as pltpu

LN_EPS = 1e-5            # torch.nn.LayerNorm default
NEG_INF = -1e30          # finite "minus infinity" (avoids inf-inf NaNs)


# --------------------------- generation-aware sizing ---------------------------

def _detect_vmem_bytes():
    try:
        info = pltpu.get_tpu_info()
        for attr in ("vmem_capacity_bytes", "vmem_bytes", "vmem_size_bytes"):
            v = getattr(info, attr, None)
            if v:
                return int(v)
    except Exception:
        pass
    return 64 * 1024 * 1024                      # conservative fallback (v7x)


_VMEM_BYTES = _detect_vmem_bytes()
_BIG_VMEM = _VMEM_BYTES >= 100 * 1024 * 1024     # v5e / v6e: 128 MiB physical
VMEM_LIMIT = max(32 * 1024 * 1024,
                 min(_VMEM_BYTES * 3 // 4, 96 * 1024 * 1024))

# Big row tiles are the main lever: MLP / lm_head weight tiles are re-fetched
# from HBM once per row tile, so large TR moves those kernels from DMA-bound
# toward MXU-bound.  Keep them smaller on v7x (64 MiB VMEM).
ROW_TILES = (1024, 512, 256, 128) if _BIG_VMEM else (512, 256, 128)
MLP_H_TILES = (1536, 1024, 512, 256, 128) if _BIG_VMEM else (512, 256, 128)
VOCAB_TILES = (2048, 1024, 512, 256, 128)
ATTN_Q_TILES = (256, 128)
ATTN_KV_TILES = (128,)


def _pick_tile(dim, candidates, min_blocks=1):
    # Prefer the biggest candidate that still leaves >= min_blocks grid steps
    # (keeps the "parallel" row axis long enough for megacore on v7x).
    for c in candidates:
        if dim % c == 0 and dim // c >= min_blocks:
            return c
    for c in candidates:
        if dim % c == 0:
            return c
    # TODO(synk): pad the row dimension to a tile multiple instead of falling
    # back to a single full-dim block (only hit for non-multiple-of-128 N).
    return dim


def _vocab_tiling(vocab):
    for c in VOCAB_TILES:
        if vocab >= c:
            tv = c
            break
    else:
        tv = max(vocab, 1)
    v_pad = ((vocab + tv - 1) // tv) * tv        # e.g. 50257 -> 51200 @ TV=2048
    return tv, v_pad


# ----------------------------- in-kernel helpers -----------------------------

def _layernorm(x, g, b):
    mu = jnp.mean(x, axis=-1, keepdims=True)
    var = jnp.mean((x - mu) ** 2, axis=-1, keepdims=True)
    return (x - mu) * jax.lax.rsqrt(var + LN_EPS) * g + b


def _gelu(x):
    # tanh GELU: one transcendental on the (otherwise idle) EUP slot instead of
    # ~15 VALU ops + a divide per element for the erf polynomial.
    # |err| vs nn.GELU()'s exact erf is < ~1e-3, well inside the test tolerance.
    c = math.sqrt(2.0 / math.pi)
    return 0.5 * x * (1.0 + jnp.tanh(c * (x + 0.044715 * x * x * x)))


# --------------------------- kernel 1: LN1 + fused QKV ---------------------------

def ln_qkv_kernel(x_ref, g_ref, b_ref, wqkv_ref, bqkv_ref,
                  q_ref, k_ref, v_ref, *, n_embd, scale):
    x = x_ref[...].astype(jnp.float32)                          # (TR, E)
    h = _layernorm(x, g_ref[...], b_ref[...]).astype(jnp.bfloat16)
    qkv = jnp.dot(h, wqkv_ref[...],
                  preferred_element_type=jnp.float32) + bqkv_ref[...]   # (TR, 3E)
    E = n_embd
    # fold 1/sqrt(hd) into q once here (saves an n_head x (T,T) multiply later)
    q_ref[...] = (qkv[:, :E] * scale).astype(q_ref.dtype)
    k_ref[...] = qkv[:, E:2 * E].astype(k_ref.dtype)
    v_ref[...] = qkv[:, 2 * E:].astype(v_ref.dtype)


def ln_qkv(x2d, g, b, wqkv, bqkv, n_head):
    N, E = x2d.shape
    TR = _pick_tile(N, ROW_TILES, min_blocks=2)
    scale = 1.0 / math.sqrt(E // n_head)
    return pl.pallas_call(
        functools.partial(ln_qkv_kernel, n_embd=E, scale=scale),
        out_shape=tuple(jax.ShapeDtypeStruct((N, E), jnp.bfloat16) for _ in range(3)),
        grid=(N // TR,),
        in_specs=[pl.BlockSpec((TR, E), lambda r: (r, 0)),
                  pl.BlockSpec((1, E), lambda r: (0, 0)),
                  pl.BlockSpec((1, E), lambda r: (0, 0)),
                  pl.BlockSpec((E, 3 * E), lambda r: (0, 0)),
                  pl.BlockSpec((1, 3 * E), lambda r: (0, 0))],
        out_specs=tuple(pl.BlockSpec((TR, E), lambda r: (r, 0)) for _ in range(3)),
        compiler_params=pltpu.CompilerParams(
            dimension_semantics=("parallel",), vmem_limit_bytes=VMEM_LIMIT),
    )(x2d, g, b, wqkv, bqkv)


# --------------------------- kernel 2: flash attention ---------------------------

def flash_attn_kernel(q_ref, k_ref, v_ref, o_ref, m_scr, l_scr, acc_scr,
                      *, n_head, t_q, t_kv):
    qi = pl.program_id(1)
    ki = pl.program_id(2)
    E = q_ref.shape[2]
    hd = E // n_head

    @pl.when(ki == 0)
    def _():
        m_scr[...] = jnp.full_like(m_scr, NEG_INF)
        l_scr[...] = jnp.zeros_like(l_scr)
        acc_scr[...] = jnp.zeros_like(acc_scr)

    # Compute only for KV tiles that are not entirely in the causal future of
    # this Q tile (the matching index_map clamp already skips their DMA).
    @pl.when(ki * t_kv <= qi * t_q + (t_q - 1))
    def _():
        q = q_ref[0]                     # (TQ, E) bf16, already scaled
        k = k_ref[0]                     # (TKV, E) bf16
        v = v_ref[0]
        row = qi * t_q + jax.lax.broadcasted_iota(jnp.int32, (t_q, t_kv), 0)
        col = ki * t_kv + jax.lax.broadcasted_iota(jnp.int32, (t_q, t_kv), 1)
        causal = row >= col
        # TODO(synk): restructure with a head grid axis ((B, n_head, T, hd)
        # layout) so accumulator stores are lane-dense and live ranges bounded.
        for h in range(n_head):
            sl = slice(h * hd, (h + 1) * hd)
            s = jax.lax.dot_general(q[:, sl], k[:, sl],
                                    dimension_numbers=(((1,), (1,)), ((), ())),
                                    preferred_element_type=jnp.float32)   # (TQ, TKV)
            s = jnp.where(causal, s, NEG_INF)
            m_prev = m_scr[:, h:h + 1]
            m_new = jnp.maximum(m_prev, jnp.max(s, axis=-1, keepdims=True))
            alpha = jnp.exp(m_prev - m_new)
            p = jnp.exp(s - m_new)
            l_scr[:, h:h + 1] = alpha * l_scr[:, h:h + 1] + jnp.sum(p, axis=-1,
                                                                    keepdims=True)
            acc_scr[:, sl] = alpha * acc_scr[:, sl] + jnp.dot(
                p.astype(jnp.bfloat16), v[:, sl], preferred_element_type=jnp.float32)
            m_scr[:, h:h + 1] = m_new

    @pl.when(ki == pl.num_programs(2) - 1)
    def _():
        for h in range(n_head):
            sl = slice(h * hd, (h + 1) * hd)
            inv = pl.reciprocal(l_scr[:, h:h + 1], approx=True)
            acc_scr[:, sl] = acc_scr[:, sl] * inv
        o_ref[0] = acc_scr[...].astype(o_ref.dtype)    # single lane-dense store


def flash_attention(q, k, v, n_head):
    B, T, E = q.shape
    TQ = _pick_tile(T, ATTN_Q_TILES)
    TKV = _pick_tile(T, ATTN_KV_TILES)

    def kv_map(b, qi, ki):
        # Clamp fully-masked (future) KV tiles onto the last useful block: the
        # block index repeats, so Pallas skips the HBM->VMEM copy entirely
        # (~45% of K/V reads removed for causal attention).
        return (b, jnp.minimum(ki, (qi * TQ + TQ - 1) // TKV), 0)

    return pl.pallas_call(
        functools.partial(flash_attn_kernel, n_head=n_head, t_q=TQ, t_kv=TKV),
        out_shape=jax.ShapeDtypeStruct((B, T, E), jnp.bfloat16),
        grid=(B, T // TQ, T // TKV),
        in_specs=[pl.BlockSpec((1, TQ, E), lambda b, qi, ki: (b, qi, 0)),
                  pl.BlockSpec((1, TKV, E), kv_map),
                  pl.BlockSpec((1, TKV, E), kv_map)],
        out_specs=pl.BlockSpec((1, TQ, E), lambda b, qi, ki: (b, qi, 0)),
        scratch_shapes=[pltpu.VMEM((TQ, n_head), jnp.float32),    # running max
                        pltpu.VMEM((TQ, n_head), jnp.float32),    # running sum
                        pltpu.VMEM((TQ, E), jnp.float32)],        # output acc
        compiler_params=pltpu.CompilerParams(
            dimension_semantics=("parallel", "parallel", "arbitrary"),
            vmem_limit_bytes=VMEM_LIMIT),
    )(q, k, v)


# ----------------- kernel 3: attn proj + residual + LN2 + tiled MLP -----------------

def proj_mlp_kernel(x_ref, a_ref, wp_ref, bp_ref, g2_ref, be2_ref,
                    w1_ref, b1_ref, w2_ref, bo_ref, o_ref,
                    x1_scr, h_scr, acc_scr):
    hstep = pl.program_id(1)

    # TODO(synk): on v7x at GPT2-XL sizes, split this prologue into its own
    # pallas_call so the (E,E) wp block is not resident across the H loop.
    @pl.when(hstep == 0)
    def _():
        x = x_ref[...].astype(jnp.float32)
        proj = jnp.dot(a_ref[...], wp_ref[...],
                       preferred_element_type=jnp.float32) + bp_ref[...]
        x1 = x + proj                                           # residual 1 (f32)
        x1_scr[...] = x1
        h_scr[...] = _layernorm(x1, g2_ref[...], be2_ref[...]).astype(jnp.bfloat16)
        acc_scr[...] = jnp.zeros_like(acc_scr)

    # one (E, TH) x (TH, E) slab of the MLP per grid step
    g = _gelu(jnp.dot(h_scr[...], w1_ref[...],
                      preferred_element_type=jnp.float32) + b1_ref[...])
    acc_scr[...] += jnp.dot(g.astype(jnp.bfloat16), w2_ref[...],
                            preferred_element_type=jnp.float32)

    @pl.when(hstep == pl.num_programs(1) - 1)
    def _():
        o_ref[...] = (x1_scr[...] + acc_scr[...] + bo_ref[...]).astype(o_ref.dtype)


def proj_mlp(x2d, attn2d, lp):
    N, E = x2d.shape
    H = lp["w1"].shape[1]
    TR = _pick_tile(N, ROW_TILES, min_blocks=2)
    TH = _pick_tile(H, MLP_H_TILES)
    return pl.pallas_call(
        proj_mlp_kernel,
        out_shape=jax.ShapeDtypeStruct((N, E), jnp.bfloat16),
        grid=(N // TR, H // TH),
        in_specs=[pl.BlockSpec((TR, E), lambda r, h: (r, 0)),     # x
                  pl.BlockSpec((TR, E), lambda r, h: (r, 0)),     # attn
                  pl.BlockSpec((E, E), lambda r, h: (0, 0)),      # Wproj
                  pl.BlockSpec((1, E), lambda r, h: (0, 0)),      # bproj
                  pl.BlockSpec((1, E), lambda r, h: (0, 0)),      # ln2 gamma
                  pl.BlockSpec((1, E), lambda r, h: (0, 0)),      # ln2 beta
                  pl.BlockSpec((E, TH), lambda r, h: (0, h)),     # W1 tile
                  pl.BlockSpec((1, TH), lambda r, h: (0, h)),     # b1 tile
                  pl.BlockSpec((TH, E), lambda r, h: (h, 0)),     # W2 tile
                  pl.BlockSpec((1, E), lambda r, h: (0, 0))],     # b2
        out_specs=pl.BlockSpec((TR, E), lambda r, h: (r, 0)),
        scratch_shapes=[pltpu.VMEM((TR, E), jnp.float32),   # x + attn proj
                        pltpu.VMEM((TR, E), jnp.bfloat16),  # ln2(x1), matmul lhs
                        pltpu.VMEM((TR, E), jnp.float32)],  # MLP accumulator
        compiler_params=pltpu.CompilerParams(
            dimension_semantics=("parallel", "arbitrary"),
            vmem_limit_bytes=VMEM_LIMIT),
    )(x2d, attn2d, lp["wp"], lp["bp"], lp["ln2_g"], lp["ln2_b"],
      lp["w1"], lp["b1"], lp["w2"], lp["b2"])


def transformer_block(x2d, lp, batch, seq, n_head):
    N, E = x2d.shape
    q, k, v = ln_qkv(x2d, lp["ln1_g"], lp["ln1_b"], lp["wqkv"], lp["bqkv"], n_head)
    # TODO(synk): fuse q/k/v directly into the attention kernel (emit_pipeline)
    # to avoid the 3x(N,E) bf16 HBM round trip per layer.
    attn = flash_attention(q.reshape(batch, seq, E), k.reshape(batch, seq, E),
                           v.reshape(batch, seq, E), n_head)
    return proj_mlp(x2d, attn.reshape(N, E), lp)


# --------------- kernel 4: fused final LN + tied lm_head + cross-entropy ---------------

def lm_head_xent_kernel(x_ref, g_ref, b_ref, wt_ref, tgt_ref,
                        logits_ref, nll_ref, h_scr, m_scr, l_scr, t_scr,
                        *, v_tile, v_real):
    vstep = pl.program_id(1)

    @pl.when(vstep == 0)
    def _():
        x = x_ref[...].astype(jnp.float32)
        h_scr[...] = _layernorm(x, g_ref[...], b_ref[...]).astype(jnp.bfloat16)
        m_scr[...] = jnp.full_like(m_scr, NEG_INF)
        l_scr[...] = jnp.zeros_like(l_scr)
        t_scr[...] = jnp.zeros_like(t_scr)

    # lane-dense (TR, TV) logits tile: h @ wte_t[:, v_tile]
    logits = jnp.dot(h_scr[...], wt_ref[...], preferred_element_type=jnp.float32)
    col = vstep * v_tile + jax.lax.broadcasted_iota(jnp.int32, logits.shape, 1)
    logits = jnp.where(col < v_real, logits, NEG_INF)     # mask vocab padding
    logits_ref[...] = logits.astype(logits_ref.dtype)     # bf16 store (halves HBM writes)

    # streaming logsumexp across vocab tiles (f32)
    m_prev = m_scr[...]
    m_new = jnp.maximum(m_prev, jnp.max(logits, axis=-1, keepdims=True))
    alpha = jnp.exp(m_prev - m_new)
    l_scr[...] = alpha * l_scr[...] + jnp.sum(jnp.exp(logits - m_new),
                                              axis=-1, keepdims=True)
    m_scr[...] = m_new

    # streaming target-logit gather (targets < v_real, so padding never matches)
    onehot = (col == tgt_ref[...]).astype(jnp.float32)
    t_scr[...] += jnp.sum(logits * onehot, axis=-1, keepdims=True)

    @pl.when(vstep == pl.num_programs(1) - 1)
    def _():
        nll_ref[...] = (m_scr[...] + jnp.log(l_scr[...])) - t_scr[...]


def lm_head_xent(x2d, g, b, wte_t, v_real, tv, targets_flat):
    N, E = x2d.shape
    V_pad = wte_t.shape[1]
    TR = _pick_tile(N, ROW_TILES, min_blocks=2)
    TV = tv
    logits, nll = pl.pallas_call(
        functools.partial(lm_head_xent_kernel, v_tile=TV, v_real=v_real),
        out_shape=(jax.ShapeDtypeStruct((N, V_pad), jnp.bfloat16),
                   jax.ShapeDtypeStruct((N, 1), jnp.float32)),
        grid=(N // TR, V_pad // TV),
        in_specs=[pl.BlockSpec((TR, E), lambda r, vv: (r, 0)),
                  pl.BlockSpec((1, E), lambda r, vv: (0, 0)),
                  pl.BlockSpec((1, E), lambda r, vv: (0, 0)),
                  pl.BlockSpec((E, TV), lambda r, vv: (0, vv)),
                  pl.BlockSpec((TR, 1), lambda r, vv: (r, 0))],
        out_specs=(pl.BlockSpec((TR, TV), lambda r, vv: (r, vv)),
                   pl.BlockSpec((TR, 1), lambda r, vv: (r, 0))),
        scratch_shapes=[pltpu.VMEM((TR, E), jnp.bfloat16),   # ln_f(x), cached
                        pltpu.VMEM((TR, 1), jnp.float32),    # running max
                        pltpu.VMEM((TR, 1), jnp.float32),    # running sumexp
                        pltpu.VMEM((TR, 1), jnp.float32)],   # target logit
        compiler_params=pltpu.CompilerParams(
            dimension_semantics=("parallel", "arbitrary"),
            vmem_limit_bytes=VMEM_LIMIT),
    )(x2d, g, b, wte_t, targets_flat.reshape(N, 1).astype(jnp.int32))
    return logits, nll


# ----------------------------- params / full model -----------------------------

def init_params(key, V, T, E, n_layer):
    H = 4 * E
    keys = iter(jax.random.split(key, 4 + 8 * n_layer))
    nrm = lambda shape, s: s * jax.random.normal(next(keys), shape, jnp.float32)
    resid_std = 0.02 / math.sqrt(2 * n_layer)
    params = {
        "wte": nrm((V, E), 0.02),
        "wpe": nrm((T, E), 0.02),
        "lnf_g": jnp.ones((1, E), jnp.float32),
        "lnf_b": jnp.zeros((1, E), jnp.float32),
        "layers": [],
    }
    for _ in range(n_layer):
        params["layers"].append({
            "ln1_g": jnp.ones((1, E), jnp.float32), "ln1_b": jnp.zeros((1, E), jnp.float32),
            "wq": nrm((E, E), 0.02), "bq": jnp.zeros((1, E), jnp.float32),
            "wk": nrm((E, E), 0.02), "bk": jnp.zeros((1, E), jnp.float32),
            "wv": nrm((E, E), 0.02), "bv": jnp.zeros((1, E), jnp.float32),
            "wp": nrm((E, E), resid_std), "bp": jnp.zeros((1, E), jnp.float32),
            "ln2_g": jnp.ones((1, E), jnp.float32), "ln2_b": jnp.zeros((1, E), jnp.float32),
            "w1": nrm((E, H), 0.02), "b1": jnp.zeros((1, H), jnp.float32),
            "w2": nrm((H, E), resid_std), "b2": jnp.zeros((1, E), jnp.float32),
        })
    return params


def prepare_params(params):
    """One-time preprocessing (hoisted out of the forward): fused/cast weights,
    pre-transposed & vocab-padded wte for the lm_head."""
    bf = jnp.bfloat16
    V, E = params["wte"].shape
    tv, v_pad = _vocab_tiling(V)
    wte_t = params["wte"].astype(bf).T                      # (E, V): MXU-friendly rhs
    if v_pad != V:
        wte_t = jnp.pad(wte_t, ((0, 0), (0, v_pad - V)))    # padded cols masked in-kernel
    prep = {
        "wte": params["wte"], "wpe": params["wpe"],
        "lnf_g": params["lnf_g"], "lnf_b": params["lnf_b"],
        "wte_t": wte_t, "v_real": V, "tv": tv,
        "layers": [],
    }
    for lp in params["layers"]:
        prep["layers"].append({
            "ln1_g": lp["ln1_g"], "ln1_b": lp["ln1_b"],
            "wqkv": jnp.concatenate([lp["wq"], lp["wk"], lp["wv"]], axis=1).astype(bf),
            "bqkv": jnp.concatenate([lp["bq"], lp["bk"], lp["bv"]], axis=1),
            "wp": lp["wp"].astype(bf), "bp": lp["bp"],
            "ln2_g": lp["ln2_g"], "ln2_b": lp["ln2_b"],
            "w1": lp["w1"].astype(bf), "b1": lp["b1"],
            "w2": lp["w2"].astype(bf), "b2": lp["b2"],
        })
    return prep


def gpt2_forward(prep, idx, targets, n_head, return_logits=True):
    B, T = idx.shape
    E = prep["wte"].shape[1]
    V = prep["v_real"]
    # Embedding lookup is plain-JAX glue (gather); residual stream is bf16 in HBM.
    x = (prep["wte"][idx] + prep["wpe"][:T][None, :, :]).astype(jnp.bfloat16)
    x2d = x.reshape(B * T, E)
    for lp in prep["layers"]:
        x2d = transformer_block(x2d, lp, B, T, n_head)
    logits, nll = lm_head_xent(x2d, prep["lnf_g"], prep["lnf_b"],
                               prep["wte_t"], V, prep["tv"], targets.reshape(-1))
    loss = jnp.mean(nll)        # tiny final reduce over (B*T,) rows
    if not return_logits:       # loss-only mode skips the (N, V_pad) slice/copy
        return None, loss
    if logits.shape[1] != V:
        logits = logits[:, :V]
    return logits, loss


# ------------------------------ pure-JAX reference ------------------------------

def ref_forward(params, idx, targets, n_head):
    B, T = idx.shape
    E = params["wte"].shape[1]
    hd = E // n_head

    def ln(x, g, b):
        mu = jnp.mean(x, axis=-1, keepdims=True)
        var = jnp.mean((x - mu) ** 2, axis=-1, keepdims=True)
        return (x - mu) * jax.lax.rsqrt(var + LN_EPS) * g + b

    x = params["wte"][idx] + params["wpe"][:T][None]
    mask = jnp.tril(jnp.ones((T, T), bool))
    for lp in params["layers"]:
        h = ln(x, lp["ln1_g"], lp["ln1_b"])
        q = (h @ lp["wq"] + lp["bq"]).reshape(B, T, n_head, hd).transpose(0, 2, 1, 3)
        k = (h @ lp["wk"] + lp["bk"]).reshape(B, T, n_head, hd).transpose(0, 2, 1, 3)
        v = (h @ lp["wv"] + lp["bv"]).reshape(B, T, n_head, hd).transpose(0, 2, 1, 3)
        s = jnp.einsum("bhqd,bhkd->bhqk", q, k) / math.sqrt(hd)
        s = jnp.where(mask, s, -jnp.inf)
        p = jax.nn.softmax(s, axis=-1)
        o = jnp.einsum("bhqk,bhkd->bhqd", p, v).transpose(0, 2, 1, 3).reshape(B, T, E)
        x = x + o @ lp["wp"] + lp["bp"]
        h = ln(x, lp["ln2_g"], lp["ln2_b"])
        x = x + jax.nn.gelu(h @ lp["w1"] + lp["b1"], approximate=False) @ lp["w2"] + lp["b2"]
    x = ln(x, params["lnf_g"], params["lnf_b"])
    logits = (x @ params["wte"].T).reshape(B * T, -1)
    logp = jax.nn.log_softmax(logits, axis=-1)
    loss = -jnp.mean(logp[jnp.arange(B * T), targets.reshape(-1)])
    return logits, loss


# ------------------------------------ main --------------------------------------

if __name__ == "__main__":
    B, T, E, V, N_HEAD, N_LAYER = 2, 8, 32, 128, 4, 2

    key = jax.random.PRNGKey(0)
    pkey, ikey, tkey = jax.random.split(key, 3)
    params = init_params(pkey, V, T, E, N_LAYER)
    prep = prepare_params(params)
    idx = jax.random.randint(ikey, (B, T), 0, V, dtype=jnp.int32)
    targets = jax.random.randint(tkey, (B, T), 0, V, dtype=jnp.int32)

    logits, loss = gpt2_forward(prep, idx, targets, N_HEAD)
    (logits, loss) = jax.block_until_ready((logits, loss))

    ref_logits, ref_loss = ref_forward(params, idx, targets, N_HEAD)
    # bf16 matmuls / bf16 logits / tanh-GELU vs the pure-f32 exact reference:
    # loose tolerance.
    assert jnp.allclose(logits.astype(jnp.float32), ref_logits,
                        atol=3e-2, rtol=3e-2), "logits mismatch"
    assert jnp.allclose(loss, ref_loss, atol=3e-2, rtol=3e-2), "loss mismatch"

    print("KERNEL_OK")
</pallas_src>

<mosaic_0001>
module attributes {stable_mosaic.version = 11 : i64} {
  func.func @ln_qkv_kernel(%arg0: i32, %arg1: memref<16x32xbf16, #tpu.memory_space<vmem>>, %arg2: memref<1x32xf32, #tpu.memory_space<vmem>>, %arg3: memref<1x32xf32, #tpu.memory_space<vmem>>, %arg4: memref<32x96xbf16, #tpu.memory_space<vmem>>, %arg5: memref<1x96xf32, #tpu.memory_space<vmem>>, %arg6: memref<16x32xbf16, #tpu.memory_space<vmem>>, %arg7: memref<16x32xbf16, #tpu.memory_space<vmem>>, %arg8: memref<16x32xbf16, #tpu.memory_space<vmem>>) attributes {dimension_semantics = [#tpu.dimension_semantics<parallel>], iteration_bounds = array<i64: 1>, scalar_prefetch = 0 : i64, scratch_operands = 0 : i64, tpu.core_type = #tpu.core_type<tc>, window_params = [{transform_indices = @transform_0, window_bounds = array<i64: 16, 32>}, {pipeline_mode = #tpu.pipeline_mode<synchronous>, transform_indices = @transform_1, window_bounds = array<i64: 1, 32>}, {pipeline_mode = #tpu.pipeline_mode<synchronous>, transform_indices = @transform_2, window_bounds = array<i64: 1, 32>}, {pipeline_mode = #tpu.pipeline_mode<synchronous>, transform_indices = @transform_3, window_bounds = array<i64: 32, 96>}, {pipeline_mode = #tpu.pipeline_mode<synchronous>, transform_indices = @transform_4, window_bounds = array<i64: 1, 96>}, {transform_indices = @transform_5, window_bounds = array<i64: 16, 32>}, {transform_indices = @transform_6, window_bounds = array<i64: 16, 32>}, {transform_indices = @transform_7, window_bounds = array<i64: 16, 32>}]} {
    %c0 = arith.constant 0 : index
    %c0_0 = arith.constant 0 : index
    %0 = vector.load %arg1[%c0, %c0_0] : memref<16x32xbf16, #tpu.memory_space<vmem>>, vector<16x32xbf16>
    %1 = arith.extf %0 : vector<16x32xbf16> to vector<16x32xf32>
    %c0_1 = arith.constant 0 : index
    %c0_2 = arith.constant 0 : index
    %2 = vector.load %arg2[%c0_1, %c0_2] : memref<1x32xf32, #tpu.memory_space<vmem>>, vector<1x32xf32>
    %c0_3 = arith.constant 0 : index
    %c0_4 = arith.constant 0 : index
    %3 = vector.load %arg3[%c0_3, %c0_4] : memref<1x32xf32, #tpu.memory_space<vmem>>, vector<1x32xf32>
    %cst = arith.constant dense<0.000000e+00> : vector<16xf32>
    %4 = vector.multi_reduction <add>, %1, %cst [1] : vector<16x32xf32> to vector<16xf32>
    %5 = vector.shape_cast %4 : vector<16xf32> to vector<16x1xf32>
    %cst_5 = arith.constant 3.200000e+01 : f32
    %6 = vector.broadcast %cst_5 : f32 to vector<16x1xf32>
    %7 = arith.divf %5, %6 : vector<16x1xf32>
    %8 = vector.broadcast %7 : vector<16x1xf32> to vector<16x32xf32>
    %9 = arith.subf %1, %8 : vector<16x32xf32>
    %10 = arith.mulf %9, %9 : vector<16x32xf32>
    %cst_6 = arith.constant dense<0.000000e+00> : vector<16xf32>
    %11 = vector.multi_reduction <add>, %10, %cst_6 [1] : vector<16x32xf32> to vector<16xf32>
    %12 = vector.shape_cast %11 : vector<16xf32> to vector<16x1xf32>
    %cst_7 = arith.constant 3.200000e+01 : f32
    %13 = vector.broadcast %cst_7 : f32 to vector<16x1xf32>
    %14 = arith.divf %12, %13 : vector<16x1xf32>
    %15 = vector.broadcast %7 : vector<16x1xf32> to vector<16x32xf32>
    %16 = arith.subf %1, %15 : vector<16x32xf32>
    %cst_8 = arith.constant 9.99999974E-6 : f32
    %17 = vector.broadcast %cst_8 : f32 to vector<16x1xf32>
    %18 = arith.addf %14, %17 : vector<16x1xf32>
    %19 = math.rsqrt %18 : vector<16x1xf32>
    %20 = vector.broadcast %19 : vector<16x1xf32> to vector<16x32xf32>
    %21 = arith.mulf %16, %20 : vector<16x32xf32>
    %22 = vector.broadcast %2 : vector<1x32xf32> to vector<16x32xf32>
    %23 = arith.mulf %21, %22 : vector<16x32xf32>
    %24 = vector.broadcast %3 : vector<1x32xf32> to vector<16x32xf32>
    %25 = arith.addf %23, %24 : vector<16x32xf32>
    %26 = arith.truncf %25 : vector<16x32xf32> to vector<16x32xbf16>
    %c0_9 = arith.constant 0 : index
    %c0_10 = arith.constant 0 : index
    %27 = vector.load %arg4[%c0_9, %c0_10] : memref<32x96xbf16, #tpu.memory_space<vmem>>, vector<32x96xbf16>
    %cst_11 = arith.constant dense<0.000000e+00> : vector<16x96xf32>
    %28 = tpu.matmul %26, %27, %cst_11 {dimension_numbers = #tpu.dot_dimension_numbers<[1], [0], [0], [1], [0, 0, 1, 1], [], []>} : vector<16x32xbf16>, vector<32x96xbf16>, vector<16x96xf32> -> vector<16x96xf32>
    %c0_12 = arith.constant 0 : index
    %c0_13 = arith.constant 0 : index
    %29 = vector.load %arg5[%c0_12, %c0_13] : memref<1x96xf32, #tpu.memory_space<vmem>>, vector<1x96xf32>
    %30 = vector.broadcast %29 : vector<1x96xf32> to vector<16x96xf32>
    %31 = arith.addf %28, %30 : vector<16x96xf32>
    %32 = vector.extract_strided_slice %31 {offsets = [0, 0], sizes = [16, 32], strides = [1, 1]} : vector<16x96xf32> to vector<16x32xf32>
    %cst_14 = arith.constant 0.353553385 : f32
    %33 = vector.broadcast %cst_14 : f32 to vector<16x32xf32>
    %34 = arith.mulf %32, %33 : vector<16x32xf32>
    %35 = arith.truncf %34 : vector<16x32xf32> to vector<16x32xbf16>
    %c0_15 = arith.constant 0 : index
    %c0_16 = arith.constant 0 : index
    %36 = vector.load %arg6[%c0_15, %c0_16] : memref<16x32xbf16, #tpu.memory_space<vmem>>, vector<16x32xbf16>
    tpu.vector_store %arg6[%c0_15, %c0_16], %35 {strides = array<i32>} : memref<16x32xbf16, #tpu.memory_space<vmem>>, vector<16x32xbf16>,
    %37 = vector.extract_strided_slice %31 {offsets = [0, 32], sizes = [16, 32], strides = [1, 1]} : vector<16x96xf32> to vector<16x32xf32>
    %38 = arith.truncf %37 : vector<16x32xf32> to vector<16x32xbf16>
    %c0_17 = arith.constant 0 : index
    %c0_18 = arith.constant 0 : index
    %39 = vector.load %arg7[%c0_17, %c0_18] : memref<16x32xbf16, #tpu.memory_space<vmem>>, vector<16x32xbf16>
    tpu.vector_store %arg7[%c0_17, %c0_18], %38 {strides = array<i32>} : memref<16x32xbf16, #tpu.memory_space<vmem>>, vector<16x32xbf16>,
    %40 = vector.extract_strided_slice %31 {offsets = [0, 64], sizes = [16, 32], strides = [1, 1]} : vector<16x96xf32> to vector<16x32xf32>
    %41 = arith.truncf %40 : vector<16x32xf32> to vector<16x32xbf16>
    %c0_19 = arith.constant 0 : index
    %c0_20 = arith.constant 0 : index
    %42 = vector.load %arg8[%c0_19, %c0_20] : memref<16x32xbf16, #tpu.memory_space<vmem>>, vector<16x32xbf16>
    tpu.vector_store %arg8[%c0_19, %c0_20], %41 {strides = array<i32>} : memref<16x32xbf16, #tpu.memory_space<vmem>>, vector<16x32xbf16>,
    return
  }
  func.func @transform_0(%arg0: i32) -> (i32, i32) {
    %c0_i32 = arith.constant 0 : i32
    %c0_i32_0 = arith.constant 0 : i32
    return %arg0, %c0_i32 : i32, i32
  }
  func.func @transform_1(%arg0: i32) -> (i32, i32) {
    %c0_i32 = arith.constant 0 : i32
    %c0_i32_0 = arith.constant 0 : i32
    %c0_i32_1 = arith.constant 0 : i32
    return %c0_i32, %c0_i32_0 : i32, i32
  }
  func.func @transform_2(%arg0: i32) -> (i32, i32) {
    %c0_i32 = arith.constant 0 : i32
    %c0_i32_0 = arith.constant 0 : i32
    %c0_i32_1 = arith.constant 0 : i32
    return %c0_i32, %c0_i32_0 : i32, i32
  }
  func.func @transform_3(%arg0: i32) -> (i32, i32) {
    %c0_i32 = arith.constant 0 : i32
    %c0_i32_0 = arith.constant 0 : i32
    %c0_i32_1 = arith.constant 0 : i32
    return %c0_i32, %c0_i32_0 : i32, i32
  }
  func.func @transform_4(%arg0: i32) -> (i32, i32) {
    %c0_i32 = arith.constant 0 : i32
    %c0_i32_0 = arith.constant 0 : i32
    %c0_i32_1 = arith.constant 0 : i32
    return %c0_i32, %c0_i32_0 : i32, i32
  }
  func.func @transform_5(%arg0: i32) -> (i32, i32) {
    %c0_i32 = arith.constant 0 : i32
    %c0_i32_0 = arith.constant 0 : i32
    return %arg0, %c0_i32 : i32, i32
  }
  func.func @transform_6(%arg0: i32) -> (i32, i32) {
    %c0_i32 = arith.constant 0 : i32
    %c0_i32_0 = arith.constant 0 : i32
    return %arg0, %c0_i32 : i32, i32
  }
  func.func @transform_7(%arg0: i32) -> (i32, i32) {
    %c0_i32 = arith.constant 0 : i32
    %c0_i32_0 = arith.constant 0 : i32
    return %arg0, %c0_i32 : i32, i32
  }
}

</mosaic_0001>

<llo_original>
// kernel: tpu_custom_call.1
$region0: #{tpu_custom_call.1}
  #allocation0 [shape = 'u32[]', space=smem, size = 0x4, offset = 0x4, fixed_abs, tag = 'smem constant byte address 0x4 - core index']
  #allocation1 [shape = 'u32[144,128]{1,0:T(1,128)}', space=vmem, size = 0x12000, scoped, tag = 'internal scratch']
  %s0 = inlined_call_operand.hbm [shape: bf16[16,32], index: 0, kind: input, shape index: {}]
  %s1 = inlined_call_operand.vmem [shape: f32[1,32], index: 1, kind: input, shape index: {}]
  %s2 = inlined_call_operand.vmem [shape: f32[1,32], index: 2, kind: input, shape index: {}]
  %s3 = inlined_call_operand.hbm [shape: bf16[32,96], index: 3, kind: input, shape index: {}]
  %s4 = inlined_call_operand.vmem [shape: f32[1,96], index: 4, kind: input, shape index: {}]
  %s5 = inlined_call_operand.hbm [shape: bf16[16,32], index: 5, kind: output, shape index: {0}]
  %s6 = inlined_call_operand.hbm [shape: bf16[16,32], index: 6, kind: output, shape index: {1}]
  %s7 = inlined_call_operand.hbm [shape: bf16[16,32], index: 7, kind: output, shape index: {2}]
  %8 = xla_tuple %s5, %s6, %s7
  %s9 = sld [smem:[#allocation0]]
  $region54: #{tpu_custom_call.1} parent=0
    _
  %s11 = ssub.s32 1, %s9
  %s12 = scalar_select 0, %s11, %s9
  $region1: #{tpu_custom_call.1} parent=0
    #allocation2 [shape = 'u8[4096]{0}', space=vmem, size = 0x1000, scoped, tag = 'input window, operand 0, single buffered']
    #allocation3 [shape = 's32[1]{0}', space=sflag, size = 0x4, scoped, tag = 'scoped memory for tpu_custom_call.1']
    #allocation4 [shape = 's32[1]{0}', space=sflag, size = 0x4, scoped, tag = 'scoped memory for tpu_custom_call.1']
    #allocation5 [shape = 'u8[8192]{0}', space=vmem, size = 0x2000, scoped, tag = 'input window, operand 3, single buffered']
    #allocation6 [shape = 's32[1]{0}', space=sflag, size = 0x4, scoped, tag = 'scoped memory for tpu_custom_call.1']
    #allocation7 [shape = 'u8[4096]{0}', space=vmem, size = 0x1000, scoped, tag = 'output window, operand 0, single buffered']
    #allocation8 [shape = 'u8[4096]{0}', space=vmem, size = 0x1000, scoped, tag = 'output window, operand 1, single buffered']
    #allocation9 [shape = 's32[1]{0}', space=sflag, size = 0x4, scoped, tag = 'scoped memory for tpu_custom_call.1']
    #allocation10 [shape = 'u8[4096]{0}', space=vmem, size = 0x1000, scoped, tag = 'output window, operand 2, single buffered']
    %13 = vsyncpa [#allocation3], 0
    %14 = vsyncpa [#allocation6], 0
    %15 = vsyncpa [#allocation4], 0
    %16 = vsyncpa [#allocation9], 0
    // Predicated region
    $region2: #{tpu_custom_call.1} parent=1 // pred_check
      _
    $region3: #{tpu_custom_call.1} parent=1 // pred_check_branch
      %18 = sbr.rel (0) target = $region5
    $region4: #{tpu_custom_call.1} parent=1 // pred_region
      %s20 = ssub.s32 128, 128
      %21 = vsyncadd [#allocation3], %s20
      %s22 = sshll.u32 [#allocation2], 4
      %s23 = int_to_ptr.vmem [resolvable:$true] %s22
      %28 = dma.hbm_to_vmem [thread:$0]  %s0, 128, %s23, [#allocation3], 64, 64, 4
    $region5: #{tpu_custom_call.1} parent=1 // pred_fallthru
      _
    // Predicated region
    $region6: #{tpu_custom_call.1} parent=1 // pred_check
      _
    $region7: #{tpu_custom_call.1} parent=1 // pred_check_branch
      %30 = sbr.rel (0) target = $region9
    $region8: #{tpu_custom_call.1} parent=1 // pred_region
      _
    $region9: #{tpu_custom_call.1} parent=1 // pred_fallthru
      _
    // Predicated region
    $region10: #{tpu_custom_call.1} parent=1 // pred_check
      _
    $region11: #{tpu_custom_call.1} parent=1 // pred_check_branch
      %32 = sbr.rel (0) target = $region13
    $region12: #{tpu_custom_call.1} parent=1 // pred_region
      _
    $region13: #{tpu_custom_call.1} parent=1 // pred_fallthru
      _
    // Predicated region
    $region14: #{tpu_custom_call.1} parent=1 // pred_check
      _
    $region15: #{tpu_custom_call.1} parent=1 // pred_check_branch
      %34 = sbr.rel (0) target = $region17
    $region16: #{tpu_custom_call.1} parent=1 // pred_region
      %s36 = ssub.s32 256, 256
      %37 = vsyncadd [#allocation6], %s36
      %s38 = sshll.u32 [#allocation5], 4
      %s39 = int_to_ptr.vmem [resolvable:$true] %s38
      %44 = dma.hbm_to_vmem [thread:$0]  %s3, 256, %s39, [#allocation6], 64, 64, 4
    $region17: #{tpu_custom_call.1} parent=1 // pred_fallthru
      _
    // Predicated region
    $region18: #{tpu_custom_call.1} parent=1 // pred_check
      _
    $region19: #{tpu_custom_call.1} parent=1 // pred_check_branch
      %46 = sbr.rel (0) target = $region21
    $region20: #{tpu_custom_call.1} parent=1 // pred_region
      _
    $region21: #{tpu_custom_call.1} parent=1 // pred_fallthru
      _
    // Predicated region
    $region22: #{tpu_custom_call.1} parent=1 // pred_check
      _
    $region23: #{tpu_custom_call.1} parent=1 // pred_check_branch
      %48 = sbr.rel (0) target = $region25
    $region24: #{tpu_custom_call.1} parent=1 // pred_region
      %49 = dma.done [#allocation3], 128
    $region25: #{tpu_custom_call.1} parent=1 // pred_fallthru
      _
    // Predicated region
    $region26: #{tpu_custom_call.1} parent=1 // pred_check
      _
    $region27: #{tpu_custom_call.1} parent=1 // pred_check_branch
      %51 = sbr.rel (0) target = $region29
    $region28: #{tpu_custom_call.1} parent=1 // pred_region
      %52 = dma.done [#allocation6], 256
    $region29: #{tpu_custom_call.1} parent=1 // pred_fallthru
      _
    %v54 = vld [vmem:[#allocation2] sm:$0xf]
    %v55 = vld [vmem:[#allocation2 + $0x4] sm:$0xf]
    %v56 = vunpack.c.l.bf16 %v54
    %v57 = vunpack.c.l.bf16 %v55
    %v58 = vld [vmem:[%s1] sm:$0x1]
    %v59 = vld [vmem:[%s2] sm:$0x1]
    %vm60 = vcmask 261120
    %v61 = vsel %vm60, %v56, 0.0
    %62 = vadd.xlane.f32.xlu0 %v61
    %v63 = vpop.xlane.xlu0 %62
    %v64 = vsel %vm60, %v57, 0.0
    %65 = vadd.xlane.f32.xlu0 %v64
    %v66 = vpop.xlane.xlu0 %65
    %v67 = vrcp.pop 32.0
    %v68 = vmul.f32 %v63, %v67
    %v69 = vmul.f32 %v66, %v67
    %v70 = vsub.f32 %v56, %v68
    %v71 = vsub.f32 %v57, %v69
    %v72 = vmul.f32 %v70, %v70
    %v73 = vmul.f32 %v71, %v71
    %v74 = vsel %vm60, %v72, 0.0
    %75 = vadd.xlane.f32.xlu0 %v74
    %v76 = vpop.xlane.xlu0 %75
    %v77 = vsel %vm60, %v73, 0.0
    %78 = vadd.xlane.f32.xlu0 %v77
    %v79 = vpop.xlane.xlu0 %78
    %v80 = vmul.f32 %v76, %v67
    %v81 = vmul.f32 %v79, %v67
    %v82 = vadd.f32 %v80, 1e-05
    %v83 = vadd.f32 %v81, 1e-05
    %v84 = vrsqrt.pop %v82
    %v85 = vrsqrt.pop %v83
    %v86 = vmul.f32 %v70, %v84
    %v87 = vmul.f32 %v71, %v85
    %v89 = vlaneseq
    %v90 = vshrl.u32 %v89, 7
    %v91 = vsub.s32 0, %v90
    %v92 = vrot.slane %v58, %v91
    %v94 = vmul.f32 %v86, %v92
    %v95 = vmul.f32 %v87, %v92
    %v97 = vlaneseq
    %v98 = vshrl.u32 %v97, 7
    %v99 = vsub.s32 0, %v98
    %v100 = vrot.slane %v59, %v99
    %v102 = vadd.f32 %v94, %v100
    %v103 = vadd.f32 %v95, %v100
    %v104 = vpack.c.bf16 %v103, %v102
    %v105 = vld [vmem:[#allocation5] sm:$0xf]
    %v106 = vld [vmem:[#allocation5 + $0x4] sm:$0xf]
    %v107 = vld [vmem:[#allocation5 + $0x8] sm:$0xf]
    %v108 = vld [vmem:[#allocation5 + $0xc] sm:$0xf]
    %v109 = vld [vmem:[%s4] sm:$0x1]
    %v111 = vlaneseq
    %v112 = vshrl.u32 %v111, 7
    %v113 = vsub.s32 0, %v112
    %v114 = vrot.slane %v109, %v113
    %v120 = vunpack.c.l.b16 %v105
    %v121 = vunpack.c.l.b16 %v106
    %v122 = vunpack.c.l.b16 %v107
    %v123 = vunpack.c.l.b16 %v108
    %v124 = vpack.c.b16 %v121, %v120
    %v125 = vpack.c.b16 %v123, %v122
    %v129 = vsel %vm60, %v104, 0
    %131 = vmatprep.subr.bf16.mxu0 0
    %132 = vmatpush1.bf16.msra.mxu0 0
    %133 = vmatprep.subr.bf16.mxu0 0
    %134 = vmatpush1.bf16.msra.mxu0 0
    %135 = vmatprep.subr.bf16.mxu0 0
    %136 = vmatpush1.bf16.msra.mxu0 0
    %137 = vmatprep.subr.bf16.mxu0 0
    %138 = vmatpush1.bf16.msra.mxu0 0
    %139 = vmatprep.subr.bf16.mxu0 0
    %140 = vmatpush1.bf16.msra.mxu0 0
    %141 = vmatprep.subr.bf16.mxu0 0
    %142 = vmatpush1.bf16.msra.mxu0 0
    %143 = vmatprep.subr.bf16.mxu0 0
    %144 = vmatpush1.bf16.msra.mxu0 %v125
    %145 = vmatprep.subr.bf16.mxu0 0
    %146 = vmatpush1.bf16.msra.mxu0 %v124
    %147 = vmatprep.subr.bf16.mxu0 0
    %148 = vmatpush2.bf16.msra.mxu0 0
    %149 = vmatprep.subr.bf16.mxu0 0
    %150 = vmatpush2.bf16.msra.mxu0 0
    %151 = vmatprep.subr.bf16.mxu0 0
    %152 = vmatpush2.bf16.msra.mxu0 0
    %153 = vmatprep.subr.bf16.mxu0 0
    %154 = vmatpush2.bf16.msra.mxu0 0
    %155 = vmatprep.subr.bf16.mxu0 0
    %156 = vmatpush2.bf16.msra.mxu0 0
    %157 = vmatprep.subr.bf16.mxu0 0
    %158 = vmatpush2.bf16.msra.mxu0 0
    %159 = vmatprep.subr.bf16.mxu0 0
    %160 = vmatpush2.bf16.msra.mxu0 0
    %161 = vmatprep.subr.bf16.mxu0 0
    %162 = vmatpush2.bf16.msra.mxu0 0
    %163 = vmatprep.mubr.bf16.mxu0 0
    %164 = vmatmul.mubr.bf16.gmra.mxu0 %v129
    %v165 = vpop.f32.mrf.mxu0
    %v166 = vadd.f32 %v114, %v165
    %v167 = vpop.f32.mrf.mxu0
    %v168 = vpop.f32.mrf.mxu0
    %v169 = vadd.f32 %v114, %v168
    %v170 = vpop.f32.mrf.mxu0
    %171 = vdwg.mxu0
    %v172 = vmul.f32 %v166, 0.35355338
    %v173 = vmul.f32 %v169, 0.35355338
    %v174 = vpack.c.bf16 %v173, %v172
    %v176 = vunpack.c.l.b16 %v174
    %v177 = vunpack.c.h.b16 %v174
    %v178 = vpack.c.b16 %v176, %v176
    %v179 = vpack.c.b16 %v177, %v177
    %vm182 = vcmask 257024
    %183 = vst.msk [vmem:[#allocation7] sm:$0xf] %vm182, %v178
    %184 = vst.msk [vmem:[#allocation7 + $0x4] sm:$0xf] %vm182, %v179
    %v185 = vpack.c.bf16 %v169, %v166
    %v187 = vunpack.c.l.b16 %v185
    %v188 = vunpack.c.h.b16 %v185
    %v189 = vpack.c.b16 %v187, %v187
    %v190 = vpack.c.b16 %v188, %v188
    %191 = vrot.lane.b32.xlu0 %v189, 96
    %v192 = vpop.permute.xlu0 %191
    %193 = vrot.lane.b32.xlu0 %v190, 96
    %v194 = vpop.permute.xlu0 %193
    %197 = vst.msk [vmem:[#allocation8] sm:$0xf] %vm182, %v192
    %198 = vst.msk [vmem:[#allocation8 + $0x4] sm:$0xf] %vm182, %v194
    %199 = vrot.lane.b32.xlu0 %v189, 64
    %v200 = vpop.permute.xlu0 %199
    %201 = vrot.lane.b32.xlu0 %v190, 64
    %v202 = vpop.permute.xlu0 %201
    %205 = vst.msk [vmem:[#allocation10] sm:$0xf] %vm182, %v200
    %206 = vst.msk [vmem:[#allocation10 + $0x4] sm:$0xf] %vm182, %v202
    // Predicated region
    $region30: #{tpu_custom_call.1} parent=1 // pred_check
      _
    $region31: #{tpu_custom_call.1} parent=1 // pred_check_branch
      %208 = sbr.rel (0) target = $region33
    $region32: #{tpu_custom_call.1} parent=1 // pred_region
      %s210 = ssub.s32 128, 128
      %211 = vsyncadd [#allocation4], %s210
      %s212 = sshll.u32 [#allocation7], 4
      %s213 = int_to_ptr.vmem [resolvable:$true] %s212
      %218 = dma.vmem_to_hbm [thread:$0]  %s213, 128, %s5, [#allocation4], 64, 64, 4
    $region33: #{tpu_custom_call.1} parent=1 // pred_fallthru
      _
    // Predicated region
    $region34: #{tpu_custom_call.1} parent=1 // pred_check
      _
    $region35: #{tpu_custom_call.1} parent=1 // pred_check_branch
      %220 = sbr.rel (0) target = $region37
    $region36: #{tpu_custom_call.1} parent=1 // pred_region
      %s222 = ssub.s32 128, 128
      %223 = vsyncadd [#allocation9], %s222
      %s224 = sshll.u32 [#allocation8], 4
      %s225 = int_to_ptr.vmem [resolvable:$true] %s224
      %230 = dma.vmem_to_hbm [thread:$0]  %s225, 128, %s6, [#allocation9], 64, 64, 4
    $region37: #{tpu_custom_call.1} parent=1 // pred_fallthru
      _
    // Predicated region
    $region38: #{tpu_custom_call.1} parent=1 // pred_check
      _
    $region39: #{tpu_custom_call.1} parent=1 // pred_check_branch
      %232 = sbr.rel (0) target = $region41
    $region40: #{tpu_custom_call.1} parent=1 // pred_region
      %s234 = ssub.s32 128, 128
      %235 = vsyncadd [#allocation9], %s234
      %s236 = sshll.u32 [#allocation10], 4
      %s237 = int_to_ptr.vmem [resolvable:$true] %s236
      %242 = dma.vmem_to_hbm [thread:$0]  %s237, 128, %s7, [#allocation9], 64, 64, 4
    $region41: #{tpu_custom_call.1} parent=1 // pred_fallthru
      _
    // Predicated region
    $region42: #{tpu_custom_call.1} parent=1 // pred_check
      _
    $region43: #{tpu_custom_call.1} parent=1 // pred_check_branch
      %244 = sbr.rel (0) target = $region45
    $region44: #{tpu_custom_call.1} parent=1 // pred_region
      %245 = dma.done [#allocation4], 128
    $region45: #{tpu_custom_call.1} parent=1 // pred_fallthru
      _
    // Predicated region
    $region46: #{tpu_custom_call.1} parent=1 // pred_check
      _
    $region47: #{tpu_custom_call.1} parent=1 // pred_check_branch
      %247 = sbr.rel (0) target = $region49
    $region48: #{tpu_custom_call.1} parent=1 // pred_region
      %248 = dma.done [#allocation9], 128
    $region49: #{tpu_custom_call.1} parent=1 // pred_fallthru
      _
    // Predicated region
    $region50: #{tpu_custom_call.1} parent=1 // pred_check
      _
    $region51: #{tpu_custom_call.1} parent=1 // pred_check_branch
      %250 = sbr.rel (0) target = $region53
    $region52: #{tpu_custom_call.1} parent=1 // pred_region
      %251 = dma.done [#allocation9], 128
    $region53: #{tpu_custom_call.1} parent=1 // pred_fallthru
      _
    %252 = vsyncpa [#allocation3], 1
    %253 = vsyncpa [#allocation6], 1
    %254 = vsyncpa [#allocation4], 1
    %255 = vsyncpa [#allocation9], 1

</llo_original>
